<compile_context>
chip_gen: v7x
topology: tpu7x:2x2x1
jax: 0.10.0
libtpu: 0.0.40
codegen_flags: <defaults>
</compile_context>

<pallas_src>
import jax
import jax.numpy as jnp
from jax.experimental import pallas as pl
from jax.experimental.pallas import tpu as pltpu


def _downsample_sel(H, W, Ho, Wo, dtype):
    """(H*W, Ho*Wo) 0/1 matrix: column (j*Wo+k) selects input element (2j, 2k)."""
    jj, kk = jnp.meshgrid(jnp.arange(Ho), jnp.arange(Wo), indexing="ij")
    rows = (2 * jj) * W + 2 * kk
    cols = jj * Wo + kk
    sel = jnp.zeros((H * W, Ho * Wo), dtype)
    return sel.at[rows.ravel(), cols.ravel()].set(jnp.asarray(1, dtype))


def make_lambda_shortcut(N, C, H, W, planes, dtype=jnp.float32,
                         images_per_block=None):
    """Builds the Pallas callable implementing the option-A shortcut lambda."""
    pad = planes // 4
    C_out = C + 2 * pad
    Ho, Wo = -(-H // 2), -(-W // 2)          # ceil-div, matches x[:, :, ::2, ::2]
    HW, HoWo = H * W, Ho * Wo

    if images_per_block is None:
        # A few images per grid step amortizes the ~0.35us/step overhead while
        # keeping double-buffered blocks tiny (<< 64 MiB v7x VMEM).
        images_per_block = next(b for b in (8, 4, 2, 1) if N % b == 0)
    Nb = images_per_block
    assert N % Nb == 0, (N, Nb)

    sel = _downsample_sel(H, W, Ho, Wo, dtype)

    def kernel(x_ref, sel_ref, o_ref):
        # x_ref:   (Nb, C,     H*W)
        # sel_ref: (H*W, Ho*Wo)          (resident across all grid steps)
        # o_ref:   (Nb, C_out, Ho*Wo)
        if pad > 0:
            o_ref[...] = jnp.zeros_like(o_ref)       # zero pad channels once
        s = sel_ref[...]
        for b in range(Nb):                           # static unroll, Nb <= 8
            # Exact downsample: each output element sums one 1.0*x term.
            y = jnp.dot(x_ref[b], s, preferred_element_type=jnp.float32)
            o_ref[b, pad:pad + C, :] = y.astype(o_ref.dtype)

    itemsize = jnp.dtype(dtype).itemsize
    cost = pl.CostEstimate(
        # Semantically a strided copy + zero pad: advertise it as memory bound.
        flops=2 * N * C * HoWo,
        transcendentals=0,
        bytes_accessed=(N * C * HW + HW * HoWo + N * C_out * HoWo) * itemsize,
    )

    fn = pl.pallas_call(
        kernel,
        out_shape=jax.ShapeDtypeStruct((N, C_out, HoWo), dtype),
        grid=(N // Nb,),
        in_specs=[
            pl.BlockSpec((Nb, C, HW), lambda n: (n, 0, 0)),   # real channels only
            pl.BlockSpec((HW, HoWo), lambda n: (0, 0)),       # constant block
        ],
        out_specs=pl.BlockSpec((Nb, C_out, HoWo), lambda n: (n, 0, 0)),
        compiler_params=pltpu.CompilerParams(
            dimension_semantics=("parallel",)),               # image axis -> both TCs
        cost_estimate=cost,
    )

    @jax.jit
    def apply(x):
        x2 = x.reshape(N, C, HW)              # contiguous, lane-dense presentation
        out = fn(x2, sel)                     # (N, C_out, Ho*Wo), lane-dense stores
        return out.reshape(N, C_out, Ho, Wo)

    return apply, pad


if __name__ == "__main__":
    # Small deterministic example consistent with the module's usage.
    N, C, H, W = 2, 4, 16, 16
    planes = 2 * C        # typical ResNet option-A usage: out planes = 2*in -> pad = 2

    key = jax.random.PRNGKey(0)
    x = jax.random.normal(key, (N, C, H, W), jnp.float32)

    shortcut, pad = make_lambda_shortcut(N, C, H, W, planes)
    out = jax.block_until_ready(shortcut(x))

    # Pure-JAX reference of the PyTorch lambda.
    ref = jnp.pad(x[:, :, ::2, ::2], ((0, 0), (pad, pad), (0, 0), (0, 0)))

    assert out.shape == ref.shape, (out.shape, ref.shape)
    assert jnp.allclose(out, ref, atol=1e-6), "mismatch vs reference"
    print("KERNEL_OK")
</pallas_src>

<mosaic_0001>
module attributes {stable_mosaic.version = 11 : i64} {
  func.func @kernel(%arg0: i32, %arg1: memref<2x4x256xf32, #tpu.memory_space<vmem>>, %arg2: memref<256x64xf32, #tpu.memory_space<vmem>>, %arg3: memref<2x8x64xf32, #tpu.memory_space<vmem>>) attributes {dimension_semantics = [#tpu.dimension_semantics<parallel>], iteration_bounds = array<i64: 1>, scalar_prefetch = 0 : i64, scratch_operands = 0 : i64, tpu.core_type = #tpu.core_type<tc>, window_params = [{transform_indices = @transform_0, window_bounds = array<i64: 2, 4, 256>}, {pipeline_mode = #tpu.pipeline_mode<synchronous>, transform_indices = @transform_1, window_bounds = array<i64: 256, 64>}, {transform_indices = @transform_2, window_bounds = array<i64: 2, 8, 64>}]} {
    %cst = arith.constant 0.000000e+00 : f32
    %0 = vector.broadcast %cst : f32 to vector<2x8x64xf32>
    %c0 = arith.constant 0 : index
    %c0_0 = arith.constant 0 : index
    %c0_1 = arith.constant 0 : index
    %1 = vector.load %arg3[%c0, %c0_0, %c0_1] : memref<2x8x64xf32, #tpu.memory_space<vmem>>, vector<2x8x64xf32>
    tpu.vector_store %arg3[%c0, %c0_0, %c0_1], %0 {strides = array<i32>} : memref<2x8x64xf32, #tpu.memory_space<vmem>>, vector<2x8x64xf32>,
    %c0_2 = arith.constant 0 : index
    %c0_3 = arith.constant 0 : index
    %2 = vector.load %arg2[%c0_2, %c0_3] : memref<256x64xf32, #tpu.memory_space<vmem>>, vector<256x64xf32>
    %c0_4 = arith.constant 0 : index
    %c0_5 = arith.constant 0 : index
    %c0_6 = arith.constant 0 : index
    %3 = vector.load %arg1[%c0_4, %c0_5, %c0_6] : memref<2x4x256xf32, #tpu.memory_space<vmem>>, vector<1x4x256xf32>
    %4 = vector.shape_cast %3 : vector<1x4x256xf32> to vector<4x256xf32>
    %cst_7 = arith.constant dense<0.000000e+00> : vector<4x64xf32>
    %5 = tpu.matmul %4, %2, %cst_7 {dimension_numbers = #tpu.dot_dimension_numbers<[1], [0], [0], [1], [0, 0, 1, 1], [], []>} : vector<4x256xf32>, vector<256x64xf32>, vector<4x64xf32> -> vector<4x64xf32>
    %c0_8 = arith.constant 0 : index
    %c2 = arith.constant 2 : index
    %c0_9 = arith.constant 0 : index
    %6 = vector.load %arg3[%c0_8, %c2, %c0_9] : memref<2x8x64xf32, #tpu.memory_space<vmem>>, vector<1x4x64xf32>
    %7 = vector.shape_cast %6 : vector<1x4x64xf32> to vector<4x64xf32>
    %8 = vector.shape_cast %5 : vector<4x64xf32> to vector<1x4x64xf32>
    tpu.vector_store %arg3[%c0_8, %c2, %c0_9], %8 {strides = array<i32>} : memref<2x8x64xf32, #tpu.memory_space<vmem>>, vector<1x4x64xf32>,
    %c1 = arith.constant 1 : index
    %c0_10 = arith.constant 0 : index
    %c0_11 = arith.constant 0 : index
    %9 = vector.load %arg1[%c1, %c0_10, %c0_11] : memref<2x4x256xf32, #tpu.memory_space<vmem>>, vector<1x4x256xf32>
    %10 = vector.shape_cast %9 : vector<1x4x256xf32> to vector<4x256xf32>
    %cst_12 = arith.constant dense<0.000000e+00> : vector<4x64xf32>
    %11 = tpu.matmul %10, %2, %cst_12 {dimension_numbers = #tpu.dot_dimension_numbers<[1], [0], [0], [1], [0, 0, 1, 1], [], []>} : vector<4x256xf32>, vector<256x64xf32>, vector<4x64xf32> -> vector<4x64xf32>
    %c1_13 = arith.constant 1 : index
    %c2_14 = arith.constant 2 : index
    %c0_15 = arith.constant 0 : index
    %12 = vector.load %arg3[%c1_13, %c2_14, %c0_15] : memref<2x8x64xf32, #tpu.memory_space<vmem>>, vector<1x4x64xf32>
    %13 = vector.shape_cast %12 : vector<1x4x64xf32> to vector<4x64xf32>
    %14 = vector.shape_cast %11 : vector<4x64xf32> to vector<1x4x64xf32>
    tpu.vector_store %arg3[%c1_13, %c2_14, %c0_15], %14 {strides = array<i32>} : memref<2x8x64xf32, #tpu.memory_space<vmem>>, vector<1x4x64xf32>,
    return
  }
  func.func @transform_0(%arg0: i32) -> (i32, i32, i32) {
    %c0_i32 = arith.constant 0 : i32
    %c0_i32_0 = arith.constant 0 : i32
    %c0_i32_1 = arith.constant 0 : i32
    return %arg0, %c0_i32, %c0_i32_0 : i32, i32, i32
  }
  func.func @transform_1(%arg0: i32) -> (i32, i32) {
    %c0_i32 = arith.constant 0 : i32
    %c0_i32_0 = arith.constant 0 : i32
    %c0_i32_1 = arith.constant 0 : i32
    return %c0_i32, %c0_i32_0 : i32, i32
  }
  func.func @transform_2(%arg0: i32) -> (i32, i32, i32) {
    %c0_i32 = arith.constant 0 : i32
    %c0_i32_0 = arith.constant 0 : i32
    %c0_i32_1 = arith.constant 0 : i32
    return %arg0, %c0_i32, %c0_i32_0 : i32, i32, i32
  }
}

</mosaic_0001>

<llo_original>
// kernel: apply.1
$region0: #{apply.1}
  #allocation0 [shape = 'u32[]', space=smem, size = 0x4, offset = 0x4, fixed_abs, tag = 'smem constant byte address 0x4 - core index']
  #allocation1 [shape = 'u32[144,128]{1,0:T(1,128)}', space=vmem, size = 0x12000, scoped, tag = 'internal scratch']
  %s0 = inlined_call_operand.vmem [shape: f32[2,4,256], index: 0, kind: input, shape index: {}]
  %s1 = inlined_call_operand.hbm [shape: f32[256,64], index: 1, kind: input, shape index: {}]
  %s2 = inlined_call_operand.vmem [shape: f32[2,8,64], index: 2, kind: output, shape index: {}]
  %s3 = sld [smem:[#allocation0]]
  $region22: #{apply.1} parent=0
    _
  %s5 = ssub.s32 1, %s3
  %s6 = scalar_select 0, %s5, %s3
  $region1: #{apply.1} parent=0
    #allocation2 [shape = 'u8[131072]{0}', space=vmem, size = 0x20000, scoped, tag = 'input window, operand 1, single buffered']
    #allocation3 [shape = 's32[1]{0}', space=sflag, size = 0x4, scoped, tag = 'scoped memory for apply.1']
    %7 = vsyncpa [#allocation3], 0
    // Predicated region
    $region2: #{apply.1} parent=1 // pred_check
      _
    $region3: #{apply.1} parent=1 // pred_check_branch
      %9 = sbr.rel (0) target = $region5
    $region4: #{apply.1} parent=1 // pred_region
      _
    $region5: #{apply.1} parent=1 // pred_fallthru
      _
    // Predicated region
    $region6: #{apply.1} parent=1 // pred_check
      _
    $region7: #{apply.1} parent=1 // pred_check_branch
      %11 = sbr.rel (0) target = $region9
    $region8: #{apply.1} parent=1 // pred_region
      %s13 = ssub.s32 4096, 4096
      %14 = vsyncadd [#allocation3], %s13
      %s15 = sshll.u32 [#allocation2], 4
      %s16 = int_to_ptr.vmem [resolvable:$true] %s15
      %21 = dma.hbm_to_vmem [thread:$0]  %s1, 4096, %s16, [#allocation3], 128, 128, 8
    $region9: #{apply.1} parent=1 // pred_fallthru
      _
    // Predicated region
    $region10: #{apply.1} parent=1 // pred_check
      _
    $region11: #{apply.1} parent=1 // pred_check_branch
      %23 = sbr.rel (0) target = $region13
    $region12: #{apply.1} parent=1 // pred_region
      %24 = dma.done [#allocation3], 4096
    $region13: #{apply.1} parent=1 // pred_fallthru
      _
    %vm25 = vcmask 523264
    %26 = vst.msk [vmem:[%s2] sm:$0xff] %vm25, 0.0
    %27 = vst.msk [vmem:[%s2 + $0x8] sm:$0xff] %vm25, 0.0
    %v28 = vld [vmem:[#allocation2] sm:$0xff]
    %v29 = vld [vmem:[#allocation2 + $0x8] sm:$0xff]
    %v30 = vld [vmem:[#allocation2 + $0x10] sm:$0xff]
    %v31 = vld [vmem:[#allocation2 + $0x18] sm:$0xff]
    %v32 = vld [vmem:[#allocation2 + $0x20] sm:$0xff]
    %v33 = vld [vmem:[#allocation2 + $0x28] sm:$0xff]
    %v34 = vld [vmem:[#allocation2 + $0x30] sm:$0xff]
    %v35 = vld [vmem:[#allocation2 + $0x38] sm:$0xff]
    %v36 = vld [vmem:[#allocation2 + $0x40] sm:$0xff]
    %v37 = vld [vmem:[#allocation2 + $0x48] sm:$0xff]
    %v38 = vld [vmem:[#allocation2 + $0x50] sm:$0xff]
    %v39 = vld [vmem:[#allocation2 + $0x58] sm:$0xff]
    %v40 = vld [vmem:[#allocation2 + $0x60] sm:$0xff]
    %v41 = vld [vmem:[#allocation2 + $0x68] sm:$0xff]
    %v42 = vld [vmem:[#allocation2 + $0x70] sm:$0xff]
    %v43 = vld [vmem:[#allocation2 + $0x78] sm:$0xff]
    %v44 = vld [vmem:[#allocation2 + $0x80] sm:$0xff]
    %v45 = vld [vmem:[#allocation2 + $0x88] sm:$0xff]
    %v46 = vld [vmem:[#allocation2 + $0x90] sm:$0xff]
    %v47 = vld [vmem:[#allocation2 + $0x98] sm:$0xff]
    %v48 = vld [vmem:[#allocation2 + $0xa0] sm:$0xff]
    %v49 = vld [vmem:[#allocation2 + $0xa8] sm:$0xff]
    %v50 = vld [vmem:[#allocation2 + $0xb0] sm:$0xff]
    %v51 = vld [vmem:[#allocation2 + $0xb8] sm:$0xff]
    %v52 = vld [vmem:[#allocation2 + $0xc0] sm:$0xff]
    %v53 = vld [vmem:[#allocation2 + $0xc8] sm:$0xff]
    %v54 = vld [vmem:[#allocation2 + $0xd0] sm:$0xff]
    %v55 = vld [vmem:[#allocation2 + $0xd8] sm:$0xff]
    %v56 = vld [vmem:[#allocation2 + $0xe0] sm:$0xff]
    %v57 = vld [vmem:[#allocation2 + $0xe8] sm:$0xff]
    %v58 = vld [vmem:[#allocation2 + $0xf0] sm:$0xff]
    %v59 = vld [vmem:[#allocation2 + $0xf8] sm:$0xff]
    %v60 = vld [vmem:[%s0] sm:$0xff]
    %v62 = vcombine.high %v60, %v60
    %64 = vmatprep.subr.mxu0 0.0
    %65 = vmatpush1.msra.mxu0 %v28
    %66 = vmatprep.subr.mxu0 0.0
    %67 = vmatpush1.msra.mxu0 %v29
    %68 = vmatprep.subr.mxu0 0.0
    %69 = vmatpush1.msra.mxu0 %v30
    %70 = vmatprep.subr.mxu0 0.0
    %71 = vmatpush1.msra.mxu0 %v31
    %72 = vmatprep.subr.mxu0 0.0
    %73 = vmatpush1.msra.mxu0 %v32
    %74 = vmatprep.subr.mxu0 0.0
    %75 = vmatpush1.msra.mxu0 %v33
    %76 = vmatprep.subr.mxu0 0.0
    %77 = vmatpush1.msra.mxu0 %v34
    %78 = vmatprep.subr.mxu0 0.0
    %79 = vmatpush1.msra.mxu0 %v35
    %80 = vmatprep.subr.mxu0 0.0
    %81 = vmatpush1.msra.mxu0 %v36
    %82 = vmatprep.subr.mxu0 0.0
    %83 = vmatpush1.msra.mxu0 %v37
    %84 = vmatprep.subr.mxu0 0.0
    %85 = vmatpush1.msra.mxu0 %v38
    %86 = vmatprep.subr.mxu0 0.0
    %87 = vmatpush1.msra.mxu0 %v39
    %88 = vmatprep.subr.mxu0 0.0
    %89 = vmatpush1.msra.mxu0 %v40
    %90 = vmatprep.subr.mxu0 0.0
    %91 = vmatpush1.msra.mxu0 %v41
    %92 = vmatprep.subr.mxu0 0.0
    %93 = vmatpush1.msra.mxu0 %v42
    %94 = vmatprep.subr.mxu0 0.0
    %95 = vmatpush1.msra.mxu0 %v43
    %96 = vmatprep.subr.mxu0 0.0
    %97 = vmatpush1.msra.mxu0 %v44
    %98 = vmatprep.subr.mxu0 0.0
    %99 = vmatpush1.msra.mxu0 %v45
    %100 = vmatprep.subr.mxu0 0.0
    %101 = vmatpush1.msra.mxu0 %v46
    %102 = vmatprep.subr.mxu0 0.0
    %103 = vmatpush1.msra.mxu0 %v47
    %104 = vmatprep.subr.mxu0 0.0
    %105 = vmatpush1.msra.mxu0 %v48
    %106 = vmatprep.subr.mxu0 0.0
    %107 = vmatpush1.msra.mxu0 %v49
    %108 = vmatprep.subr.mxu0 0.0
    %109 = vmatpush1.msra.mxu0 %v50
    %110 = vmatprep.subr.mxu0 0.0
    %111 = vmatpush1.msra.mxu0 %v51
    %112 = vmatprep.subr.mxu0 0.0
    %113 = vmatpush1.msra.mxu0 %v52
    %114 = vmatprep.subr.mxu0 0.0
    %115 = vmatpush1.msra.mxu0 %v53
    %116 = vmatprep.subr.mxu0 0.0
    %117 = vmatpush1.msra.mxu0 %v54
    %118 = vmatprep.subr.mxu0 0.0
    %119 = vmatpush1.msra.mxu0 %v55
    %120 = vmatprep.subr.mxu0 0.0
    %121 = vmatpush1.msra.mxu0 %v56
    %122 = vmatprep.subr.mxu0 0.0
    %123 = vmatpush1.msra.mxu0 %v57
    %124 = vmatprep.subr.mxu0 0.0
    %125 = vmatpush1.msra.mxu0 %v58
    %126 = vmatprep.subr.mxu0 0.0
    %127 = vmatpush1.msra.mxu0 %v59
    %128 = vmatprep.mubr.f32.mxu0 %v62
    %129 = vmatmul.mubr.f32.gmra.mrb[0].mxu0 %v60
    %v130 = vpop.f32.mrb[0].mxu0
    %v131 = vadd.f32 0.0, %v130
    %v132 = vpop.f32.mrb[0].mxu0
    %133 = vdwg.mxu0
    %vm134 = vcmask 519168
    %135 = vst.msk [vmem:[%s2 + $0x2] sm:$0xf] %vm134, %v131
    %s136 = scalar_lea.vmem %s0, 8
    %v137 = vld [vmem:[%s136] sm:$0xff]
    %v139 = vcombine.high %v137, %v137
    %141 = vmatprep.subr.mxu0 0.0
    %142 = vmatpush1.msra.mxu0 %v28
    %143 = vmatprep.subr.mxu0 0.0
    %144 = vmatpush1.msra.mxu0 %v29
    %145 = vmatprep.subr.mxu0 0.0
    %146 = vmatpush1.msra.mxu0 %v30
    %147 = vmatprep.subr.mxu0 0.0
    %148 = vmatpush1.msra.mxu0 %v31
    %149 = vmatprep.subr.mxu0 0.0
    %150 = vmatpush1.msra.mxu0 %v32
    %151 = vmatprep.subr.mxu0 0.0
    %152 = vmatpush1.msra.mxu0 %v33
    %153 = vmatprep.subr.mxu0 0.0
    %154 = vmatpush1.msra.mxu0 %v34
    %155 = vmatprep.subr.mxu0 0.0
    %156 = vmatpush1.msra.mxu0 %v35
    %157 = vmatprep.subr.mxu0 0.0
    %158 = vmatpush1.msra.mxu0 %v36
    %159 = vmatprep.subr.mxu0 0.0
    %160 = vmatpush1.msra.mxu0 %v37
    %161 = vmatprep.subr.mxu0 0.0
    %162 = vmatpush1.msra.mxu0 %v38
    %163 = vmatprep.subr.mxu0 0.0
    %164 = vmatpush1.msra.mxu0 %v39
    %165 = vmatprep.subr.mxu0 0.0
    %166 = vmatpush1.msra.mxu0 %v40
    %167 = vmatprep.subr.mxu0 0.0
    %168 = vmatpush1.msra.mxu0 %v41
    %169 = vmatprep.subr.mxu0 0.0
    %170 = vmatpush1.msra.mxu0 %v42
    %171 = vmatprep.subr.mxu0 0.0
    %172 = vmatpush1.msra.mxu0 %v43
    %173 = vmatprep.subr.mxu0 0.0
    %174 = vmatpush1.msra.mxu0 %v44
    %175 = vmatprep.subr.mxu0 0.0
    %176 = vmatpush1.msra.mxu0 %v45
    %177 = vmatprep.subr.mxu0 0.0
    %178 = vmatpush1.msra.mxu0 %v46
    %179 = vmatprep.subr.mxu0 0.0
    %180 = vmatpush1.msra.mxu0 %v47
    %181 = vmatprep.subr.mxu0 0.0
    %182 = vmatpush1.msra.mxu0 %v48
    %183 = vmatprep.subr.mxu0 0.0
    %184 = vmatpush1.msra.mxu0 %v49
    %185 = vmatprep.subr.mxu0 0.0
    %186 = vmatpush1.msra.mxu0 %v50
    %187 = vmatprep.subr.mxu0 0.0
    %188 = vmatpush1.msra.mxu0 %v51
    %189 = vmatprep.subr.mxu0 0.0
    %190 = vmatpush1.msra.mxu0 %v52
    %191 = vmatprep.subr.mxu0 0.0
    %192 = vmatpush1.msra.mxu0 %v53
    %193 = vmatprep.subr.mxu0 0.0
    %194 = vmatpush1.msra.mxu0 %v54
    %195 = vmatprep.subr.mxu0 0.0
    %196 = vmatpush1.msra.mxu0 %v55
    %197 = vmatprep.subr.mxu0 0.0
    %198 = vmatpush1.msra.mxu0 %v56
    %199 = vmatprep.subr.mxu0 0.0
    %200 = vmatpush1.msra.mxu0 %v57
    %201 = vmatprep.subr.mxu0 0.0
    %202 = vmatpush1.msra.mxu0 %v58
    %203 = vmatprep.subr.mxu0 0.0
    %204 = vmatpush1.msra.mxu0 %v59
    %205 = vmatprep.mubr.f32.mxu0 %v139
    %206 = vmatmul.mubr.f32.gmra.mrb[0].mxu0 %v137
    %v207 = vpop.f32.mrb[0].mxu0
    %v208 = vadd.f32 0.0, %v207
    %v209 = vpop.f32.mrb[0].mxu0
    %210 = vdwg.mxu0
    %s211 = scalar_lea.vmem %s2, 8
    %212 = vst.msk [vmem:[%s211 + $0x2] sm:$0xf] %vm134, %v208
    // Predicated region
    $region14: #{apply.1} parent=1 // pred_check
      _
    $region15: #{apply.1} parent=1 // pred_check_branch
      %214 = sbr.rel (0) target = $region17
    $region16: #{apply.1} parent=1 // pred_region
      _
    $region17: #{apply.1} parent=1 // pred_fallthru
      _
    // Predicated region
    $region18: #{apply.1} parent=1 // pred_check
      _
    $region19: #{apply.1} parent=1 // pred_check_branch
      %216 = sbr.rel (0) target = $region21
    $region20: #{apply.1} parent=1 // pred_region
      _
    $region21: #{apply.1} parent=1 // pred_fallthru
      _
    %217 = vsyncpa [#allocation3], 1

</llo_original>
